<compile_context>
chip_gen: v7x
topology: tpu7x:2x2x1
jax: 0.10.0
libtpu: 0.0.40
codegen_flags: <defaults>
</compile_context>

<pallas_src>
import jax
import jax.numpy as jnp
from jax.experimental import pallas as pl
from jax.experimental.pallas import tpu as pltpu

IN_FEATURES = 2
OUT_FEATURES = 2
LANES = 128          # vreg lane width: output slab is padded to this (lane-dense stores)


def _round_up(n, m):
    return ((n + m - 1) // m) * m


def _linear_kernel(x_ref, w_ref, b_ref, o_ref):
    """x_ref: (bb, IN) f32 VMEM; w_ref: (OUT, IN) f32 SMEM; b_ref: (OUT,) f32 SMEM;
    o_ref: (bb, LANES) f32 VMEM -- lane-dense output slab, lanes >= OUT are zero."""
    bb, lanes = o_ref.shape
    x = x_ref[...]                                           # (bb, IN): one vreg load
    lane = jax.lax.broadcasted_iota(jnp.int32, (bb, lanes), 1)
    out = jnp.zeros((bb, lanes), jnp.float32)
    # Statically unrolled 2x2 linear on the VPU (no MXU involvement).
    for j in range(OUT_FEATURES):
        zj = b_ref[j]                                        # SMEM scalar
        for k in range(IN_FEATURES):
            zj = zj + x[:, k:k + 1] * w_ref[j, k]            # (bb, 1) VPU FMA
        out = jnp.where(lane == j, zj, out)                  # place into output lane j
    o_ref[...] = out.astype(o_ref.dtype)                     # single unmasked lane-dense store


def net_forward(x, weight, bias, *, block_b=512):
    """Equivalent of Net.forward: z = x @ weight.T + bias.

    x:      (B, 2) float32
    weight: (2, 2) float32   (PyTorch layout: (out_features, in_features))
    bias:   (2,)   float32
    """
    B = x.shape[0]
    # Sublane-aligned batch tile; pad B up to a multiple of it if needed.
    bb = _round_up(min(block_b, B), 8)
    Bp = _round_up(B, bb)
    if Bp != B:
        x = jnp.pad(x, ((0, Bp - B), (0, 0)))

    out_padded = pl.pallas_call(
        _linear_kernel,
        out_shape=jax.ShapeDtypeStruct((Bp, LANES), x.dtype),
        grid=(Bp // bb,),
        in_specs=[
            pl.BlockSpec((bb, IN_FEATURES), lambda i: (i, 0)),         # activations in VMEM
            pl.BlockSpec(memory_space=pltpu.MemorySpace.SMEM),         # weight (2,2) scalars
            pl.BlockSpec(memory_space=pltpu.MemorySpace.SMEM),         # bias (2,) scalars
        ],
        out_specs=pl.BlockSpec((bb, LANES), lambda i: (i, 0)),
        compiler_params=pltpu.CompilerParams(
            dimension_semantics=("parallel",)),  # megacore-shard batch tiles (v7x)
    )(x, weight, bias)

    # Drop the batch padding and the lane padding of the lane-dense slab.
    return out_padded[:B, :OUT_FEATURES]


def init_params(key):
    # Deterministic init mimicking nn.Linear default: U(-1/sqrt(in), 1/sqrt(in)).
    kw, kb = jax.random.split(key)
    bound = 1.0 / jnp.sqrt(jnp.float32(IN_FEATURES))
    weight = jax.random.uniform(
        kw, (OUT_FEATURES, IN_FEATURES), jnp.float32, -bound, bound)
    bias = jax.random.uniform(kb, (OUT_FEATURES,), jnp.float32, -bound, bound)
    return weight, bias


if __name__ == "__main__":
    key = jax.random.PRNGKey(0)
    k_x, k_p, k_x2 = jax.random.split(key, 3)

    weight, bias = init_params(k_p)

    # Primary small-shape check: batch = 8 (single grid step).
    batch = 8
    x = jax.random.normal(k_x, (batch, IN_FEATURES), jnp.float32)
    z = net_forward(x, weight, bias)
    jax.block_until_ready(z)
    z_ref = x @ weight.T + bias
    assert z.shape == (batch, OUT_FEATURES)
    assert jnp.allclose(z, z_ref, atol=1e-5, rtol=1e-5)

    # Secondary check exercising the batch grid (grid=(3,)) / parallel tiling path.
    x2 = jax.random.normal(k_x2, (48, IN_FEATURES), jnp.float32)
    z2 = net_forward(x2, weight, bias, block_b=16)
    jax.block_until_ready(z2)
    assert jnp.allclose(z2, x2 @ weight.T + bias, atol=1e-5, rtol=1e-5)

    print("KERNEL_OK")
</pallas_src>

<mosaic_0001>
module attributes {stable_mosaic.version = 11 : i64} {
  func.func @_linear_kernel(%arg0: i32, %arg1: memref<8x2xf32, #tpu.memory_space<vmem>>, %arg2: memref<2x2xf32, #tpu.memory_space<smem>>, %arg3: memref<2xf32, #tpu.memory_space<smem>>, %arg4: memref<8x128xf32, #tpu.memory_space<vmem>>) attributes {dimension_semantics = [#tpu.dimension_semantics<parallel>], iteration_bounds = array<i64: 1>, scalar_prefetch = 0 : i64, scratch_operands = 0 : i64, tpu.core_type = #tpu.core_type<tc>, window_params = [{transform_indices = @transform_0, window_bounds = array<i64: 8, 2>}, {transform_indices = @transform_1, window_bounds = array<i64: 2, 2>}, {transform_indices = @transform_2, window_bounds = array<i64: 2>}, {transform_indices = @transform_3, window_bounds = array<i64: 8, 128>}]} {
    %c0 = arith.constant 0 : index
    %c0_0 = arith.constant 0 : index
    %0 = vector.load %arg1[%c0, %c0_0] : memref<8x2xf32, #tpu.memory_space<vmem>>, vector<8x2xf32>
    %1 = tpu.iota {dimensions = array<i32: 1>} : vector<8x128xi32>
    %cst = arith.constant 0.000000e+00 : f32
    %2 = vector.broadcast %cst : f32 to vector<8x128xf32>
    %c0_1 = arith.constant 0 : index
    %3 = memref.load %arg3[%c0_1] : memref<2xf32, #tpu.memory_space<smem>>
    %4 = vector.extract_strided_slice %0 {offsets = [0, 0], sizes = [8, 1], strides = [1, 1]} : vector<8x2xf32> to vector<8x1xf32>
    %c0_2 = arith.constant 0 : index
    %c0_3 = arith.constant 0 : index
    %5 = memref.load %arg2[%c0_2, %c0_3] : memref<2x2xf32, #tpu.memory_space<smem>>
    %6 = vector.broadcast %5 : f32 to vector<8x1xf32>
    %7 = arith.mulf %4, %6 : vector<8x1xf32>
    %8 = vector.broadcast %3 : f32 to vector<8x1xf32>
    %9 = arith.addf %8, %7 : vector<8x1xf32>
    %10 = vector.extract_strided_slice %0 {offsets = [0, 1], sizes = [8, 1], strides = [1, 1]} : vector<8x2xf32> to vector<8x1xf32>
    %c0_4 = arith.constant 0 : index
    %c1 = arith.constant 1 : index
    %11 = memref.load %arg2[%c0_4, %c1] : memref<2x2xf32, #tpu.memory_space<smem>>
    %12 = vector.broadcast %11 : f32 to vector<8x1xf32>
    %13 = arith.mulf %10, %12 : vector<8x1xf32>
    %14 = arith.addf %9, %13 : vector<8x1xf32>
    %c0_i32 = arith.constant 0 : i32
    %15 = vector.broadcast %c0_i32 : i32 to vector<8x128xi32>
    %16 = arith.cmpi eq, %1, %15 : vector<8x128xi32>
    %17 = vector.shape_cast %14 : vector<8x1xf32> to vector<8x1xf32>
    %18 = vector.broadcast %17 : vector<8x1xf32> to vector<8x128xf32>
    %19 = arith.select %16, %18, %2 : vector<8x128xi1>, vector<8x128xf32>
    %c1_5 = arith.constant 1 : index
    %20 = memref.load %arg3[%c1_5] : memref<2xf32, #tpu.memory_space<smem>>
    %21 = vector.extract_strided_slice %0 {offsets = [0, 0], sizes = [8, 1], strides = [1, 1]} : vector<8x2xf32> to vector<8x1xf32>
    %c1_6 = arith.constant 1 : index
    %c0_7 = arith.constant 0 : index
    %22 = memref.load %arg2[%c1_6, %c0_7] : memref<2x2xf32, #tpu.memory_space<smem>>
    %23 = vector.broadcast %22 : f32 to vector<8x1xf32>
    %24 = arith.mulf %21, %23 : vector<8x1xf32>
    %25 = vector.broadcast %20 : f32 to vector<8x1xf32>
    %26 = arith.addf %25, %24 : vector<8x1xf32>
    %27 = vector.extract_strided_slice %0 {offsets = [0, 1], sizes = [8, 1], strides = [1, 1]} : vector<8x2xf32> to vector<8x1xf32>
    %c1_8 = arith.constant 1 : index
    %c1_9 = arith.constant 1 : index
    %28 = memref.load %arg2[%c1_8, %c1_9] : memref<2x2xf32, #tpu.memory_space<smem>>
    %29 = vector.broadcast %28 : f32 to vector<8x1xf32>
    %30 = arith.mulf %27, %29 : vector<8x1xf32>
    %31 = arith.addf %26, %30 : vector<8x1xf32>
    %c1_i32 = arith.constant 1 : i32
    %32 = vector.broadcast %c1_i32 : i32 to vector<8x128xi32>
    %33 = arith.cmpi eq, %1, %32 : vector<8x128xi32>
    %34 = vector.shape_cast %31 : vector<8x1xf32> to vector<8x1xf32>
    %35 = vector.broadcast %34 : vector<8x1xf32> to vector<8x128xf32>
    %36 = arith.select %33, %35, %19 : vector<8x128xi1>, vector<8x128xf32>
    %c0_10 = arith.constant 0 : index
    %c0_11 = arith.constant 0 : index
    %37 = vector.load %arg4[%c0_10, %c0_11] : memref<8x128xf32, #tpu.memory_space<vmem>>, vector<8x128xf32>
    tpu.vector_store %arg4[%c0_10, %c0_11], %36 {strides = array<i32>} : memref<8x128xf32, #tpu.memory_space<vmem>>, vector<8x128xf32>,
    return
  }
  func.func @transform_0(%arg0: i32) -> (i32, i32) {
    %c0_i32 = arith.constant 0 : i32
    %c0_i32_0 = arith.constant 0 : i32
    return %arg0, %c0_i32 : i32, i32
  }
  func.func @transform_1(%arg0: i32) -> (i32, i32) {
    %c0_i32 = arith.constant 0 : i32
    %c0_i32_0 = arith.constant 0 : i32
    %c0_i32_1 = arith.constant 0 : i32
    return %c0_i32, %c0_i32_0 : i32, i32
  }
  func.func @transform_2(%arg0: i32) -> i32 {
    %c0_i32 = arith.constant 0 : i32
    %c0_i32_0 = arith.constant 0 : i32
    return %c0_i32 : i32
  }
  func.func @transform_3(%arg0: i32) -> (i32, i32) {
    %c0_i32 = arith.constant 0 : i32
    %c0_i32_0 = arith.constant 0 : i32
    return %arg0, %c0_i32 : i32, i32
  }
}

</mosaic_0001>

<llo_original>
// kernel: tpu_custom_call.1
$region0: #{tpu_custom_call.1}
  #allocation0 [shape = 'u32[]', space=smem, size = 0x4, offset = 0x4, fixed_abs, tag = 'smem constant byte address 0x4 - core index']
  #allocation1 [shape = 'u32[144,128]{1,0:T(1,128)}', space=vmem, size = 0x12000, scoped, tag = 'internal scratch']
  %s0 = inlined_call_operand.vmem [shape: f32[8,2], index: 0, kind: input, shape index: {}]
  %s1 = inlined_call_operand.vmem [shape: f32[2,2], index: 1, kind: input, shape index: {}]
  %s2 = inlined_call_operand.vmem [shape: f32[2], index: 2, kind: input, shape index: {}]
  %s3 = inlined_call_operand.hbm [shape: f32[8,128], index: 3, kind: output, shape index: {}]
  %s4 = sld [smem:[#allocation0]]
  $region30: #{tpu_custom_call.1} parent=0
    _
  %s6 = ssub.s32 1, %s4
  %s7 = scalar_select 0, %s6, %s4
  $region1: #{tpu_custom_call.1} parent=0
    #allocation2 [shape = 'u8[1024]{0}', space=smem, size = 0x400, scoped, tag = 'input window, operand 1, single buffered']
    #allocation3 [shape = 's32[1]{0}', space=sflag, size = 0x4, scoped, tag = 'scoped memory for tpu_custom_call.1']
    #allocation4 [shape = 's32[1]{0}', space=sflag, size = 0x4, scoped, tag = 'scoped memory for tpu_custom_call.1']
    #allocation5 [shape = 'u8[512]{0}', space=smem, size = 0x200, scoped, tag = 'input window, operand 2, single buffered']
    #allocation6 [shape = 's32[1]{0}', space=sflag, size = 0x4, scoped, tag = 'scoped memory for tpu_custom_call.1']
    #allocation7 [shape = 'u8[4096]{0}', space=vmem, size = 0x1000, scoped, tag = 'output window, operand 0, single buffered']
    %8 = vsyncpa [#allocation4], 0
    %9 = vsyncpa [#allocation6], 0
    %10 = vsyncpa [#allocation3], 0
    // Predicated region
    $region2: #{tpu_custom_call.1} parent=1 // pred_check
      _
    $region3: #{tpu_custom_call.1} parent=1 // pred_check_branch
      %12 = sbr.rel (0) target = $region5
    $region4: #{tpu_custom_call.1} parent=1 // pred_region
      _
    $region5: #{tpu_custom_call.1} parent=1 // pred_fallthru
      _
    // Predicated region
    $region6: #{tpu_custom_call.1} parent=1 // pred_check
      _
    $region7: #{tpu_custom_call.1} parent=1 // pred_check_branch
      %14 = sbr.rel (0) target = $region9
    $region8: #{tpu_custom_call.1} parent=1 // pred_region
      %s16 = ssub.s32 32, 32
      %17 = vsyncadd [#allocation4], %s16
      %s19 = sshll.u32 %s1, 4
      %s20 = int_to_ptr.vmem [resolvable:$true] %s19
      %22 = dma.vmem_to_smem %s20, 32, [#allocation2], [#allocation4]
    $region9: #{tpu_custom_call.1} parent=1 // pred_fallthru
      _
    // Predicated region
    $region10: #{tpu_custom_call.1} parent=1 // pred_check
      _
    $region11: #{tpu_custom_call.1} parent=1 // pred_check_branch
      %24 = sbr.rel (0) target = $region13
    $region12: #{tpu_custom_call.1} parent=1 // pred_region
      %s26 = ssub.s32 16, 16
      %27 = vsyncadd [#allocation6], %s26
      %s29 = sshll.u32 %s2, 4
      %s30 = int_to_ptr.vmem [resolvable:$true] %s29
      %32 = dma.vmem_to_smem %s30, 16, [#allocation5], [#allocation6]
    $region13: #{tpu_custom_call.1} parent=1 // pred_fallthru
      _
    // Predicated region
    $region14: #{tpu_custom_call.1} parent=1 // pred_check
      _
    $region15: #{tpu_custom_call.1} parent=1 // pred_check_branch
      %34 = sbr.rel (0) target = $region17
    $region16: #{tpu_custom_call.1} parent=1 // pred_region
      %35 = dma.done [#allocation4], 32
    $region17: #{tpu_custom_call.1} parent=1 // pred_fallthru
      _
    // Predicated region
    $region18: #{tpu_custom_call.1} parent=1 // pred_check
      _
    $region19: #{tpu_custom_call.1} parent=1 // pred_check_branch
      %37 = sbr.rel (0) target = $region21
    $region20: #{tpu_custom_call.1} parent=1 // pred_region
      %38 = dma.done [#allocation6], 16
    $region21: #{tpu_custom_call.1} parent=1 // pred_fallthru
      _
    %39 = sfence
    %v40 = vld [vmem:[%s0] sm:$0xff]
    %v41 = vlaneseq
    %v42 = vand.u32 %v41, 127
    %s43 = sld [smem:[#allocation5]]
    %s44 = sld [smem:[#allocation2]]
    %v45 = vstv %s44
    %v46 = vmul.f32 %v40, %v45
    %v47 = vstv %s43
    %v48 = vadd.f32 %v47, %v46
    %s49 = sld [smem:[#allocation2 + $0x1]]
    %v50 = vstv %s49
    %v51 = vmul.f32 %v40, %v50
    %53 = vrot.lane.b32.xlu0 %v51, 127
    %v54 = vpop.permute.xlu0 %53
    %v56 = vadd.f32 %v48, %v54
    %vm57 = vcmp.eq.s32.totalorder %v42, 0
    %59 = vset.pattern.permute.xlu0 0
    %60 = vperm.xlu0 %59, %v56
    %v61 = vpop.permute.xlu0 %60
    %v63 = vsel %vm57, %v61, 0.0
    %s64 = sld [smem:[#allocation5 + $0x1]]
    %s65 = sld [smem:[#allocation2 + $0x80]]
    %v66 = vstv %s65
    %v67 = vmul.f32 %v40, %v66
    %v68 = vstv %s64
    %v69 = vadd.f32 %v68, %v67
    %s70 = sld [smem:[#allocation2 + $0x81]]
    %v71 = vstv %s70
    %v72 = vmul.f32 %v40, %v71
    %74 = vrot.lane.b32.xlu0 %v72, 127
    %v75 = vpop.permute.xlu0 %74
    %v77 = vadd.f32 %v69, %v75
    %vm78 = vcmp.eq.s32.totalorder %v42, 1
    %80 = vset.pattern.permute.xlu0 0
    %81 = vperm.xlu0 %80, %v77
    %v82 = vpop.permute.xlu0 %81
    %v84 = vsel %vm78, %v82, %v63
    %85 = vst [vmem:[#allocation7] sm:$0xff] %v84
    // Predicated region
    $region22: #{tpu_custom_call.1} parent=1 // pred_check
      _
    $region23: #{tpu_custom_call.1} parent=1 // pred_check_branch
      %87 = sbr.rel (0) target = $region25
    $region24: #{tpu_custom_call.1} parent=1 // pred_region
      %s89 = ssub.s32 128, 128
      %90 = vsyncadd [#allocation3], %s89
      %s92 = sshll.u32 [#allocation7], 4
      %s93 = int_to_ptr.vmem [resolvable:$true] %s92
      %95 = dma.vmem_to_hbm [thread:$0]  %s93, 128, %s3, [#allocation3]
    $region25: #{tpu_custom_call.1} parent=1 // pred_fallthru
      _
    // Predicated region
    $region26: #{tpu_custom_call.1} parent=1 // pred_check
      _
    $region27: #{tpu_custom_call.1} parent=1 // pred_check_branch
      %97 = sbr.rel (0) target = $region29
    $region28: #{tpu_custom_call.1} parent=1 // pred_region
      %98 = dma.done [#allocation3], 128
    $region29: #{tpu_custom_call.1} parent=1 // pred_fallthru
      _
    %99 = vsyncpa [#allocation3], 1
    %100 = vsyncpa [#allocation4], 1
    %101 = vsyncpa [#allocation6], 1

</llo_original>
